<compile_context>
chip_gen: v7x
topology: tpu7x:2x2x1
jax: 0.10.0
libtpu: 0.0.40
codegen_flags: <defaults>
</compile_context>

<pallas_src>
import functools

import jax
import jax.numpy as jnp
from jax import lax
from jax.experimental import pallas as pl
from jax.experimental.pallas import tpu as pltpu


def _conv_rows_kernel(main_ref, halo_ref, w_ref, b_ref, o_ref,
                      slab_ref, acc_ref, *, K, tr, pad, W, Cout):
    # main_ref : (1, 1, tr,    Wp*Cin)  bf16  padded rows [rb*tr, rb*tr+tr)
    # halo_ref : (1, 1, 2*pad, Wp*Cin)  bf16  padded rows [rb*tr+tr, rb*tr+tr+2p)
    # w_ref    : (K, Wp*Cin, W*Cout)    bf16  per-ky block-Toeplitz weights
    # b_ref    : (1, W*Cout)            f32
    # o_ref    : (1, 1, tr, W*Cout)     bf16
    # slab_ref : (tr + 2*pad, Wp*Cin)   bf16  VMEM scratch (contiguous halo slab)
    # acc_ref  : (tr, W*Cout)           f32   VMEM scratch accumulator

    # Assemble the contiguous halo slab in VMEM (VMEM<->VMEM only, no HBM dup).
    slab_ref[0:tr, :] = main_ref[0, 0]
    slab_ref[tr:tr + 2 * pad, :] = halo_ref[0, 0]

    # kx is folded into the banded weights -> only K row-shifted matmuls, each
    # over the full lane-aligned width.  In-place accumulation in f32 scratch.
    acc_ref[...] = jnp.dot(slab_ref[0:tr, :], w_ref[0],
                           preferred_element_type=jnp.float32)
    for ky in range(1, K):                                   # static unroll, K-1 taps
        acc_ref[...] += jnp.dot(slab_ref[ky:ky + tr, :], w_ref[ky],
                                preferred_element_type=jnp.float32)

    o_ref[0, 0] = (acc_ref[...] + b_ref[...]).astype(o_ref.dtype)


def conv_end_forward(x, weight, bias, *, kernel_size=5, ratio=2,
                     compute_dtype=jnp.bfloat16):
    """x: (N, Cin, H, W) NCHW. weight: (Cout, Cin, K, K). bias: (Cout,).
    Returns PixelShuffle(conv(x)) in compute_dtype (bf16)."""
    N, Cin, H, W = x.shape
    Cout = weight.shape[0]
    K = kernel_size
    pad = K // 2
    Wp = W + 2 * pad
    r = ratio
    assert Cout % (r * r) == 0, "PixelShuffle needs Cout % ratio**2 == 0"
    lanes = W * Cout                      # packed output width (128 in the demo)
    # TODO(synk): for large W, pack g = 128/Cout (or 256/Cout) output columns per
    # matmul group instead of the whole row so the banded weight stays O(g^2).

    in_b = jnp.dtype(compute_dtype).itemsize
    out_b = jnp.dtype(compute_dtype).itemsize          # bf16 output per review
    row_in = Wp * Cin * in_b
    row_out = lanes * out_b

    # ---- generation-aware VMEM budget (v7x: 64 MiB/TC, v5e/v6e: 128 MiB) ----
    try:
        vmem_cap = int(pltpu.get_tpu_info().vmem_capacity_bytes)
    except Exception:
        vmem_cap = 64 << 20                             # conservative (v7x) fallback
    vmem_budget = int(0.40 * vmem_cap)
    vmem_limit = int(0.70 * vmem_cap)

    # ---- row-tile sizing: account for ALL resident/double-buffered buffers ----
    fixed = (2 * K * Wp * Cin * lanes * in_b            # weights x2 buffers
             + 2 * lanes * 4                            # bias x2
             + 2 * 2 * pad * row_in                     # halo blocks x2
             + 2 * pad * row_in)                        # halo part of slab scratch
    per_row = (2 * row_in                               # main block x2 buffers
               + 2 * row_out                            # output block x2 buffers
               + row_in                                 # slab scratch
               + lanes * 4)                             # f32 accumulator
    tr_cap = max(8, ((vmem_budget - fixed) // per_row) // 8 * 8)
    Hr = -(-H // 8) * 8
    tr = int(max(8, min(512, tr_cap, Hr)))              # 512-row tiles saturate HBM BW
    if N == 1 and Hr > 8:
        # v7x has 2 TensorCores: keep >= 2 blocks along a parallel grid axis.
        tr = int(min(tr, max(8, (-(-(Hr // 2) // 8)) * 8)))
    n_rb = -(-H // tr)
    H_t = n_rb * tr

    # ---- layout glue (single pass over the input; no slab duplication) ----
    x_nhwc = jnp.transpose(x, (0, 2, 3, 1))                               # (N,H,W,Cin)
    xp = jnp.pad(x_nhwc, ((0, 0), (pad, pad + (H_t - H)), (pad, pad), (0, 0)))
    xp = xp.reshape(N, H_t + 2 * pad, Wp * Cin).astype(compute_dtype)
    # TODO(synk): folding the zero-padding into the kernel (clamped DMA + pl.when
    # zeroing on boundary tiles) would save this remaining input-sized glue pass.
    main = xp[:, :H_t].reshape(N, n_rb, tr, Wp * Cin)                     # free reshape
    halo = jnp.stack([xp[:, (rb + 1) * tr:(rb + 1) * tr + 2 * pad, :]
                      for rb in range(n_rb)], axis=1)                     # (N,n_rb,2p,Wp*Cin), tiny

    # ---- per-ky block-Toeplitz (banded) weights: fold kx into the GEMM ----
    w_taps = jnp.transpose(weight, (2, 3, 1, 0))                          # (K,K,Cin,Cout)
    sel = (jnp.arange(Wp)[None, :, None]
           == jnp.arange(W)[None, None, :] + jnp.arange(K)[:, None, None])
    sel = sel.astype(weight.dtype)                                        # (K,Wp,W): [kx,v,u]
    wband = jnp.einsum('xvu,yxio->yviuo', sel, w_taps)                    # (K,Wp,Cin,W,Cout)
    wband = wband.reshape(K, Wp * Cin, lanes).astype(compute_dtype)
    b_packed = jnp.tile(bias.astype(jnp.float32), W).reshape(1, lanes)

    kernel = functools.partial(_conv_rows_kernel, K=K, tr=tr, pad=pad,
                               W=W, Cout=Cout)

    flops = 2 * N * H_t * (Wp * Cin) * lanes * K
    bytes_accessed = int(N * H_t * row_in
                         + N * n_rb * 2 * pad * row_in
                         + K * Wp * Cin * lanes * in_b + lanes * 4
                         + N * H_t * row_out)

    out_packed = pl.pallas_call(
        kernel,
        out_shape=jax.ShapeDtypeStruct((N, n_rb, tr, lanes), compute_dtype),
        grid_spec=pltpu.PrefetchScalarGridSpec(
            num_scalar_prefetch=0,
            grid=(N, n_rb),
            in_specs=[
                pl.BlockSpec((1, 1, tr, Wp * Cin), lambda n, rb: (n, rb, 0, 0)),
                pl.BlockSpec((1, 1, 2 * pad, Wp * Cin), lambda n, rb: (n, rb, 0, 0)),
                pl.BlockSpec((K, Wp * Cin, lanes), lambda n, rb: (0, 0, 0)),   # resident
                pl.BlockSpec((1, lanes), lambda n, rb: (0, 0)),                # resident
            ],
            out_specs=pl.BlockSpec((1, 1, tr, lanes), lambda n, rb: (n, rb, 0, 0)),
            scratch_shapes=[
                pltpu.VMEM((tr + 2 * pad, Wp * Cin), compute_dtype),   # halo slab
                pltpu.VMEM((tr, lanes), jnp.float32),                  # f32 accumulator
            ]),
        compiler_params=pltpu.CompilerParams(
            dimension_semantics=("parallel", "parallel"),
            vmem_limit_bytes=vmem_limit),
        cost_estimate=pl.CostEstimate(flops=flops, transcendentals=0,
                                      bytes_accessed=bytes_accessed),
    )(main, halo, wband, b_packed)

    # (N, n_rb, tr, W*Cout) -> (N, H, W, Cout): free reshape + row slice.
    y_nhwc = out_packed.reshape(N, H_t, W, Cout)[:, :H]

    # NHWC->NCHW and PixelShuffle composed into ONE bf16 transpose (layout glue).
    # TODO(synk): PixelShuffle is a pure data permutation with no compute; it
    # stays as wrapper-side XLA layout glue rather than a Pallas kernel.
    C = Cout // (r * r)
    y = y_nhwc.reshape(N, H, W, C, r, r).transpose(0, 3, 1, 4, 2, 5)
    return y.reshape(N, C, H * r, W * r)


def _reference(x, weight, bias, ratio, compute_dtype=jnp.bfloat16):
    # Pure-JAX reference (same bf16 operands, f32 accumulation).
    y = lax.conv_general_dilated(
        x.astype(compute_dtype), weight.astype(compute_dtype),
        window_strides=(1, 1), padding="SAME",
        dimension_numbers=("NCHW", "OIHW", "NCHW"),
        preferred_element_type=jnp.float32)
    y = y + bias[None, :, None, None].astype(jnp.float32)
    N, Cout, H, W = y.shape
    r = ratio
    C = Cout // (r * r)
    y = y.reshape(N, C, r, r, H, W).transpose(0, 1, 4, 2, 5, 3)
    return y.reshape(N, C, H * r, W * r)


if __name__ == "__main__":
    # small, module-consistent shapes
    N, Cin, Cout, H, W, K, ratio = 2, 4, 8, 16, 16, 5, 2

    key = jax.random.PRNGKey(0)
    kx_, kw_, kb_ = jax.random.split(key, 3)
    x = jax.random.normal(kx_, (N, Cin, H, W), dtype=jnp.float32)
    weight = jax.random.normal(kw_, (Cout, Cin, K, K), dtype=jnp.float32) * 0.05
    bias = jax.random.normal(kb_, (Cout,), dtype=jnp.float32) * 0.1

    out = conv_end_forward(x, weight, bias, kernel_size=K, ratio=ratio)
    out = jax.block_until_ready(out)

    ref = _reference(x, weight, bias, ratio)
    assert out.shape == (N, Cout // (ratio * ratio), H * ratio, W * ratio)
    out_f32 = out.astype(jnp.float32)
    max_err = jnp.max(jnp.abs(out_f32 - ref))
    assert jnp.allclose(out_f32, ref, atol=2e-2, rtol=2e-2), \
        f"mismatch vs reference (max abs err {max_err})"

    print("KERNEL_OK")
</pallas_src>

<mosaic_0001>
module attributes {stable_mosaic.version = 11 : i64} {
  func.func @_conv_rows_kernel(%arg0: i32, %arg1: i32, %arg2: memref<1x1x16x80xbf16, #tpu.memory_space<vmem>>, %arg3: memref<1x1x4x80xbf16, #tpu.memory_space<vmem>>, %arg4: memref<5x80x128xbf16, #tpu.memory_space<vmem>>, %arg5: memref<1x128xf32, #tpu.memory_space<vmem>>, %arg6: memref<1x1x16x128xbf16, #tpu.memory_space<vmem>>, %arg7: memref<20x80xbf16, #tpu.memory_space<vmem>>, %arg8: memref<16x128xf32, #tpu.memory_space<vmem>>) attributes {dimension_semantics = [#tpu.dimension_semantics<parallel>, #tpu.dimension_semantics<parallel>], iteration_bounds = array<i64: 2, 1>, scalar_prefetch = 0 : i64, scratch_operands = 2 : i64, tpu.core_type = #tpu.core_type<tc>, window_params = [{transform_indices = @transform_0, window_bounds = array<i64: 1, 1, 16, 80>}, {transform_indices = @transform_1, window_bounds = array<i64: 1, 1, 4, 80>}, {pipeline_mode = #tpu.pipeline_mode<synchronous>, transform_indices = @transform_2, window_bounds = array<i64: 5, 80, 128>}, {pipeline_mode = #tpu.pipeline_mode<synchronous>, transform_indices = @transform_3, window_bounds = array<i64: 1, 128>}, {transform_indices = @transform_4, window_bounds = array<i64: 1, 1, 16, 128>}]} {
    %c0 = arith.constant 0 : index
    %c0_0 = arith.constant 0 : index
    %c0_1 = arith.constant 0 : index
    %c0_2 = arith.constant 0 : index
    %0 = vector.load %arg2[%c0, %c0_0, %c0_1, %c0_2] : memref<1x1x16x80xbf16, #tpu.memory_space<vmem>>, vector<1x1x16x80xbf16>
    %1 = vector.shape_cast %0 : vector<1x1x16x80xbf16> to vector<16x80xbf16>
    %c0_3 = arith.constant 0 : index
    %c0_4 = arith.constant 0 : index
    %2 = vector.load %arg7[%c0_3, %c0_4] : memref<20x80xbf16, #tpu.memory_space<vmem>>, vector<16x80xbf16>
    tpu.vector_store %arg7[%c0_3, %c0_4], %1 {strides = array<i32>} : memref<20x80xbf16, #tpu.memory_space<vmem>>, vector<16x80xbf16>,
    %c0_5 = arith.constant 0 : index
    %c0_6 = arith.constant 0 : index
    %c0_7 = arith.constant 0 : index
    %c0_8 = arith.constant 0 : index
    %3 = vector.load %arg3[%c0_5, %c0_6, %c0_7, %c0_8] : memref<1x1x4x80xbf16, #tpu.memory_space<vmem>>, vector<1x1x4x80xbf16>
    %4 = vector.shape_cast %3 : vector<1x1x4x80xbf16> to vector<4x80xbf16>
    %c16 = arith.constant 16 : index
    %c0_9 = arith.constant 0 : index
    %5 = vector.load %arg7[%c16, %c0_9] : memref<20x80xbf16, #tpu.memory_space<vmem>>, vector<4x80xbf16>
    tpu.vector_store %arg7[%c16, %c0_9], %4 {strides = array<i32>} : memref<20x80xbf16, #tpu.memory_space<vmem>>, vector<4x80xbf16>,
    %c0_10 = arith.constant 0 : index
    %c0_11 = arith.constant 0 : index
    %6 = vector.load %arg7[%c0_10, %c0_11] : memref<20x80xbf16, #tpu.memory_space<vmem>>, vector<16x80xbf16>
    %c0_12 = arith.constant 0 : index
    %c0_13 = arith.constant 0 : index
    %c0_14 = arith.constant 0 : index
    %7 = vector.load %arg4[%c0_12, %c0_13, %c0_14] : memref<5x80x128xbf16, #tpu.memory_space<vmem>>, vector<1x80x128xbf16>
    %8 = vector.shape_cast %7 : vector<1x80x128xbf16> to vector<80x128xbf16>
    %cst = arith.constant dense<0.000000e+00> : vector<16x128xf32>
    %9 = tpu.matmul %6, %8, %cst {dimension_numbers = #tpu.dot_dimension_numbers<[1], [0], [0], [1], [0, 0, 1, 1], [], []>} : vector<16x80xbf16>, vector<80x128xbf16>, vector<16x128xf32> -> vector<16x128xf32>
    %c0_15 = arith.constant 0 : index
    %c0_16 = arith.constant 0 : index
    %10 = vector.load %arg8[%c0_15, %c0_16] : memref<16x128xf32, #tpu.memory_space<vmem>>, vector<16x128xf32>
    tpu.vector_store %arg8[%c0_15, %c0_16], %9 {strides = array<i32>} : memref<16x128xf32, #tpu.memory_space<vmem>>, vector<16x128xf32>,
    %c0_17 = arith.constant 0 : index
    %c0_18 = arith.constant 0 : index
    %11 = vector.load %arg8[%c0_17, %c0_18] : memref<16x128xf32, #tpu.memory_space<vmem>>, vector<16x128xf32>
    %c1 = arith.constant 1 : index
    %c0_19 = arith.constant 0 : index
    %12 = vector.load %arg7[%c1, %c0_19] : memref<20x80xbf16, #tpu.memory_space<vmem>>, vector<16x80xbf16>
    %c1_20 = arith.constant 1 : index
    %c0_21 = arith.constant 0 : index
    %c0_22 = arith.constant 0 : index
    %13 = vector.load %arg4[%c1_20, %c0_21, %c0_22] : memref<5x80x128xbf16, #tpu.memory_space<vmem>>, vector<1x80x128xbf16>
    %14 = vector.shape_cast %13 : vector<1x80x128xbf16> to vector<80x128xbf16>
    %cst_23 = arith.constant dense<0.000000e+00> : vector<16x128xf32>
    %15 = tpu.matmul %12, %14, %cst_23 {dimension_numbers = #tpu.dot_dimension_numbers<[1], [0], [0], [1], [0, 0, 1, 1], [], []>} : vector<16x80xbf16>, vector<80x128xbf16>, vector<16x128xf32> -> vector<16x128xf32>
    %16 = arith.addf %11, %15 : vector<16x128xf32>
    %c0_24 = arith.constant 0 : index
    %c0_25 = arith.constant 0 : index
    %17 = vector.load %arg8[%c0_24, %c0_25] : memref<16x128xf32, #tpu.memory_space<vmem>>, vector<16x128xf32>
    tpu.vector_store %arg8[%c0_24, %c0_25], %16 {strides = array<i32>} : memref<16x128xf32, #tpu.memory_space<vmem>>, vector<16x128xf32>,
    %c0_26 = arith.constant 0 : index
    %c0_27 = arith.constant 0 : index
    %18 = vector.load %arg8[%c0_26, %c0_27] : memref<16x128xf32, #tpu.memory_space<vmem>>, vector<16x128xf32>
    %c2 = arith.constant 2 : index
    %c0_28 = arith.constant 0 : index
    %19 = vector.load %arg7[%c2, %c0_28] : memref<20x80xbf16, #tpu.memory_space<vmem>>, vector<16x80xbf16>
    %c2_29 = arith.constant 2 : index
    %c0_30 = arith.constant 0 : index
    %c0_31 = arith.constant 0 : index
    %20 = vector.load %arg4[%c2_29, %c0_30, %c0_31] : memref<5x80x128xbf16, #tpu.memory_space<vmem>>, vector<1x80x128xbf16>
    %21 = vector.shape_cast %20 : vector<1x80x128xbf16> to vector<80x128xbf16>
    %cst_32 = arith.constant dense<0.000000e+00> : vector<16x128xf32>
    %22 = tpu.matmul %19, %21, %cst_32 {dimension_numbers = #tpu.dot_dimension_numbers<[1], [0], [0], [1], [0, 0, 1, 1], [], []>} : vector<16x80xbf16>, vector<80x128xbf16>, vector<16x128xf32> -> vector<16x128xf32>
    %23 = arith.addf %18, %22 : vector<16x128xf32>
    %c0_33 = arith.constant 0 : index
    %c0_34 = arith.constant 0 : index
    %24 = vector.load %arg8[%c0_33, %c0_34] : memref<16x128xf32, #tpu.memory_space<vmem>>, vector<16x128xf32>
    tpu.vector_store %arg8[%c0_33, %c0_34], %23 {strides = array<i32>} : memref<16x128xf32, #tpu.memory_space<vmem>>, vector<16x128xf32>,
    %c0_35 = arith.constant 0 : index
    %c0_36 = arith.constant 0 : index
    %25 = vector.load %arg8[%c0_35, %c0_36] : memref<16x128xf32, #tpu.memory_space<vmem>>, vector<16x128xf32>
    %c3 = arith.constant 3 : index
    %c0_37 = arith.constant 0 : index
    %26 = vector.load %arg7[%c3, %c0_37] : memref<20x80xbf16, #tpu.memory_space<vmem>>, vector<16x80xbf16>
    %c3_38 = arith.constant 3 : index
    %c0_39 = arith.constant 0 : index
    %c0_40 = arith.constant 0 : index
    %27 = vector.load %arg4[%c3_38, %c0_39, %c0_40] : memref<5x80x128xbf16, #tpu.memory_space<vmem>>, vector<1x80x128xbf16>
    %28 = vector.shape_cast %27 : vector<1x80x128xbf16> to vector<80x128xbf16>
    %cst_41 = arith.constant dense<0.000000e+00> : vector<16x128xf32>
    %29 = tpu.matmul %26, %28, %cst_41 {dimension_numbers = #tpu.dot_dimension_numbers<[1], [0], [0], [1], [0, 0, 1, 1], [], []>} : vector<16x80xbf16>, vector<80x128xbf16>, vector<16x128xf32> -> vector<16x128xf32>
    %30 = arith.addf %25, %29 : vector<16x128xf32>
    %c0_42 = arith.constant 0 : index
    %c0_43 = arith.constant 0 : index
    %31 = vector.load %arg8[%c0_42, %c0_43] : memref<16x128xf32, #tpu.memory_space<vmem>>, vector<16x128xf32>
    tpu.vector_store %arg8[%c0_42, %c0_43], %30 {strides = array<i32>} : memref<16x128xf32, #tpu.memory_space<vmem>>, vector<16x128xf32>,
    %c0_44 = arith.constant 0 : index
    %c0_45 = arith.constant 0 : index
    %32 = vector.load %arg8[%c0_44, %c0_45] : memref<16x128xf32, #tpu.memory_space<vmem>>, vector<16x128xf32>
    %c4 = arith.constant 4 : index
    %c0_46 = arith.constant 0 : index
    %33 = vector.load %arg7[%c4, %c0_46] : memref<20x80xbf16, #tpu.memory_space<vmem>>, vector<16x80xbf16>
    %c4_47 = arith.constant 4 : index
    %c0_48 = arith.constant 0 : index
    %c0_49 = arith.constant 0 : index
    %34 = vector.load %arg4[%c4_47, %c0_48, %c0_49] : memref<5x80x128xbf16, #tpu.memory_space<vmem>>, vector<1x80x128xbf16>
    %35 = vector.shape_cast %34 : vector<1x80x128xbf16> to vector<80x128xbf16>
    %cst_50 = arith.constant dense<0.000000e+00> : vector<16x128xf32>
    %36 = tpu.matmul %33, %35, %cst_50 {dimension_numbers = #tpu.dot_dimension_numbers<[1], [0], [0], [1], [0, 0, 1, 1], [], []>} : vector<16x80xbf16>, vector<80x128xbf16>, vector<16x128xf32> -> vector<16x128xf32>
    %37 = arith.addf %32, %36 : vector<16x128xf32>
    %c0_51 = arith.constant 0 : index
    %c0_52 = arith.constant 0 : index
    %38 = vector.load %arg8[%c0_51, %c0_52] : memref<16x128xf32, #tpu.memory_space<vmem>>, vector<16x128xf32>
    tpu.vector_store %arg8[%c0_51, %c0_52], %37 {strides = array<i32>} : memref<16x128xf32, #tpu.memory_space<vmem>>, vector<16x128xf32>,
    %c0_53 = arith.constant 0 : index
    %c0_54 = arith.constant 0 : index
    %39 = vector.load %arg8[%c0_53, %c0_54] : memref<16x128xf32, #tpu.memory_space<vmem>>, vector<16x128xf32>
    %c0_55 = arith.constant 0 : index
    %c0_56 = arith.constant 0 : index
    %40 = vector.load %arg5[%c0_55, %c0_56] : memref<1x128xf32, #tpu.memory_space<vmem>>, vector<1x128xf32>
    %41 = vector.broadcast %40 : vector<1x128xf32> to vector<16x128xf32>
    %42 = arith.addf %39, %41 : vector<16x128xf32>
    %43 = arith.truncf %42 : vector<16x128xf32> to vector<16x128xbf16>
    %c0_57 = arith.constant 0 : index
    %c0_58 = arith.constant 0 : index
    %c0_59 = arith.constant 0 : index
    %c0_60 = arith.constant 0 : index
    %44 = vector.load %arg6[%c0_57, %c0_58, %c0_59, %c0_60] : memref<1x1x16x128xbf16, #tpu.memory_space<vmem>>, vector<1x1x16x128xbf16>
    %45 = vector.shape_cast %44 : vector<1x1x16x128xbf16> to vector<16x128xbf16>
    %46 = vector.shape_cast %43 : vector<16x128xbf16> to vector<1x1x16x128xbf16>
    tpu.vector_store %arg6[%c0_57, %c0_58, %c0_59, %c0_60], %46 {strides = array<i32>} : memref<1x1x16x128xbf16, #tpu.memory_space<vmem>>, vector<1x1x16x128xbf16>,
    return
  }
  func.func @transform_0(%arg0: i32, %arg1: i32) -> (i32, i32, i32, i32) {
    %c0_i32 = arith.constant 0 : i32
    %c0_i32_0 = arith.constant 0 : i32
    %c0_i32_1 = arith.constant 0 : i32
    return %arg0, %arg1, %c0_i32, %c0_i32_0 : i32, i32, i32, i32
  }
  func.func @transform_1(%arg0: i32, %arg1: i32) -> (i32, i32, i32, i32) {
    %c0_i32 = arith.constant 0 : i32
    %c0_i32_0 = arith.constant 0 : i32
    %c0_i32_1 = arith.constant 0 : i32
    return %arg0, %arg1, %c0_i32, %c0_i32_0 : i32, i32, i32, i32
  }
  func.func @transform_2(%arg0: i32, %arg1: i32) -> (i32, i32, i32) {
    %c0_i32 = arith.constant 0 : i32
    %c0_i32_0 = arith.constant 0 : i32
    %c0_i32_1 = arith.constant 0 : i32
    %c0_i32_2 = arith.constant 0 : i32
    return %c0_i32, %c0_i32_0, %c0_i32_1 : i32, i32, i32
  }
  func.func @transform_3(%arg0: i32, %arg1: i32) -> (i32, i32) {
    %c0_i32 = arith.constant 0 : i32
    %c0_i32_0 = arith.constant 0 : i32
    %c0_i32_1 = arith.constant 0 : i32
    return %c0_i32, %c0_i32_0 : i32, i32
  }
  func.func @transform_4(%arg0: i32, %arg1: i32) -> (i32, i32, i32, i32) {
    %c0_i32 = arith.constant 0 : i32
    %c0_i32_0 = arith.constant 0 : i32
    %c0_i32_1 = arith.constant 0 : i32
    return %arg0, %arg1, %c0_i32, %c0_i32_0 : i32, i32, i32, i32
  }
}

</mosaic_0001>

<llo_original>
// kernel: tpu_custom_call.1
$region0: #{tpu_custom_call.1}
  #allocation0 [shape = 'u32[]', space=smem, size = 0x4, offset = 0x4, fixed_abs, tag = 'smem constant byte address 0x4 - core index']
  #allocation1 [shape = 'u32[144,128]{1,0:T(1,128)}', space=vmem, size = 0x12000, scoped, tag = 'internal scratch']
  #allocation2 [shape = 'bf16[20,80]{1,0:T(8,128)(2,1)}', space=vmem, size = 0x1800, scoped, tag = 'scratch operand']
  #allocation3 [shape = 'f32[16,128]{1,0:T(8,128)}', space=vmem, size = 0x2000, scoped, tag = 'scratch operand']
  %s0 = inlined_call_operand.hbm [shape: bf16[2,1,16,80], index: 0, kind: input, shape index: {}]
  %s1 = inlined_call_operand.hbm [shape: bf16[2,1,4,80], index: 1, kind: input, shape index: {}]
  %s2 = inlined_call_operand.hbm [shape: bf16[5,80,128], index: 2, kind: input, shape index: {}]
  %s3 = inlined_call_operand.vmem [shape: f32[1,128], index: 3, kind: input, shape index: {}]
  %s4 = inlined_call_operand.hbm [shape: bf16[2,1,16,128], index: 4, kind: output, shape index: {}]
  %s5 = sld [smem:[#allocation0]]
  $region61: #{tpu_custom_call.1} parent=0
    _
  %s7 = ssub.s32 1, %s5
  %s8 = scalar_select 0, %s7, %s5
  $region1: #{tpu_custom_call.1} parent=0
    #allocation4 [shape = 'u8[8192]{0}', space=vmem, size = 0x2000, scoped, tag = 'input window, operand 0']
    #allocation5 [shape = 's32[2]{0}', space=sflag, size = 0x8, scoped, tag = 'scoped memory for tpu_custom_call.1']
    #allocation6 [shape = 's32[2]{0}', space=sflag, size = 0x8, scoped, tag = 'scoped memory for tpu_custom_call.1']
    #allocation7 [shape = 'u8[2048]{0}', space=vmem, size = 0x800, scoped, tag = 'input window, operand 1']
    #allocation8 [shape = 's32[2]{0}', space=sflag, size = 0x8, scoped, tag = 'scoped memory for tpu_custom_call.1']
    #allocation9 [shape = 'u8[102400]{0}', space=vmem, size = 0x19000, scoped, tag = 'input window, operand 2, single buffered']
    #allocation10 [shape = 'u8[8192]{0}', space=vmem, size = 0x2000, scoped, tag = 'output window, operand 0']
    %9 = vsyncpa [#allocation5], 0
    %s10 = scalar_lea.sflag [#allocation5], 1
    %11 = vsyncpa %s10, 0
    %12 = vsyncpa [#allocation8], 0
    %s13 = scalar_lea.sflag [#allocation8], 1
    %14 = vsyncpa %s13, 0
    %15 = vsyncpa [#allocation6], 0
    %s16 = scalar_lea.sflag [#allocation6], 1
    %17 = vsyncpa %s16, 0
    loop: start=0, step=1, limit=4
    $region2: #{tpu_custom_call.1} parent=1 // loop_pre_header
      _
    $region3: #{tpu_custom_call.1} parent=1 // loop_header
      %s19 = sphi 0, %s23
      %p20 = scmp.ge.s32.totalorder %s19, 4
      %s26 = sphi 0, %s38
      %s27 = sphi 0, %s34
      %s28 = sphi 0, %s26
      %s29 = sphi 0, %s27
      %s30 = sphi 0, %s28
      %s31 = sphi 0, %s29
      %s43 = sphi 0, %s45
      %s46 = sphi 0, %s43
      %s47 = sphi 0, %s46
      %s63 = sphi 0, %s47
      %s71 = sphi 0, %s73
      %s74 = sphi 0, %s71
      %s75 = sphi 0, %s74
      %s91 = sphi 0, %s75
      %s95 = sphi 0, %s95
      %s97 = sphi 0, %s95
      %s98 = sphi 0, %s97
      %s112 = sphi 0, %s98
      %s116 = sphi 0, %s116
      %s118 = sphi 0, %s116
      %s119 = sphi 0, %s118
      %s133 = sphi 0, %s119
      %s141 = sphi 0, %s143
      %s144 = sphi 0, %s141
      %s145 = sphi 0, %s144
      %s161 = sphi 0, %s145
    $region4: #{tpu_custom_call.1} parent=1 // loop_header_branch
      %22 = sbr.rel (%p20) target = $region8
    $region5: #{tpu_custom_call.1} parent=1 // loop_body
      %s24 = ssub.s32 %s19, 1
      %s25 = ssub.s32 %s19, 2
      %s32 = sadd.s32 1, %s27
      %p33 = scmp.ge.s32.totalorder %s32, 1
      %s34 = scalar_select %p33, 0, %s32
      %s35 = sadd.s32 1, %s26
      %s36 = scalar_select %p33, %s35, %s26
      %p37 = scmp.ge.s32.totalorder %s36, 2
      %s38 = scalar_select %p37, 0, %s36
      %s39 = ssub.s32 %s26, %s38
      %s40 = ssub.s32 %s27, %s34
      %s41 = sor.u32 %s39, %s40
      %p42 = scmp.eq.s32.totalorder %s41, 0
      %s44 = sadd.s32 %s43, 1
      %s45 = scalar_select %p42, %s43, %s44
      %p48 = pneg %p42
      %p49 = scmp.eq.s32.totalorder %s19, 1
      %p50 = por %p48, %p49
      %p51 = scmp.ne.s32.totalorder %s43, %s46
      %p52 = scmp.eq.s32.totalorder %s19, 0
      %p53 = por %p51, %p52
      %p54 = scmp.ne.s32.totalorder %s43, %s46
      %p55 = scmp.eq.s32.totalorder %s24, 1
      %p56 = por %p54, %p55
      %p57 = scmp.ne.s32.totalorder %s46, %s47
      %p58 = scmp.eq.s32.totalorder %s24, 0
      %p59 = por %p57, %p58
      %p60 = scmp.ne.s32.totalorder %s46, %s47
      %p61 = scmp.eq.s32.totalorder %s25, 1
      %p62 = por %p60, %p61
      %p64 = scmp.ne.s32.totalorder %s47, %s63
      %p65 = scmp.eq.s32.totalorder %s25, 0
      %p66 = por %p64, %p65
      %s67 = ssub.s32 %s26, %s38
      %s68 = ssub.s32 %s27, %s34
      %s69 = sor.u32 %s67, %s68
      %p70 = scmp.eq.s32.totalorder %s69, 0
      %s72 = sadd.s32 %s71, 1
      %s73 = scalar_select %p70, %s71, %s72
      %p76 = pneg %p70
      %p77 = scmp.eq.s32.totalorder %s19, 1
      %p78 = por %p76, %p77
      %p79 = scmp.ne.s32.totalorder %s71, %s74
      %p80 = scmp.eq.s32.totalorder %s19, 0
      %p81 = por %p79, %p80
      %p82 = scmp.ne.s32.totalorder %s71, %s74
      %p83 = scmp.eq.s32.totalorder %s24, 1
      %p84 = por %p82, %p83
      %p85 = scmp.ne.s32.totalorder %s74, %s75
      %p86 = scmp.eq.s32.totalorder %s24, 0
      %p87 = por %p85, %p86
      %p88 = scmp.ne.s32.totalorder %s74, %s75
      %p89 = scmp.eq.s32.totalorder %s25, 1
      %p90 = por %p88, %p89
      %p92 = scmp.ne.s32.totalorder %s75, %s91
      %p93 = scmp.eq.s32.totalorder %s25, 0
      %p94 = por %p92, %p93
      %s96 = sadd.s32 %s95, 1
      %p99 = scmp.eq.s32.totalorder %s19, 1
      %p100 = scmp.ne.s32.totalorder %s95, %s97
      %p101 = scmp.eq.s32.totalorder %s19, 0
      %p102 = por %p100, %p101
      %p103 = scmp.ne.s32.totalorder %s95, %s97
      %p104 = scmp.eq.s32.totalorder %s24, 1
      %p105 = por %p103, %p104
      %p106 = scmp.ne.s32.totalorder %s97, %s98
      %p107 = scmp.eq.s32.totalorder %s24, 0
      %p108 = por %p106, %p107
      %p109 = scmp.ne.s32.totalorder %s97, %s98
      %p110 = scmp.eq.s32.totalorder %s25, 1
      %p111 = por %p109, %p110
      %p113 = scmp.ne.s32.totalorder %s98, %s112
      %p114 = scmp.eq.s32.totalorder %s25, 0
      %p115 = por %p113, %p114
      %s117 = sadd.s32 %s116, 1
      %p120 = scmp.eq.s32.totalorder %s19, 1
      %p121 = scmp.ne.s32.totalorder %s116, %s118
      %p122 = scmp.eq.s32.totalorder %s19, 0
      %p123 = por %p121, %p122
      %p124 = scmp.ne.s32.totalorder %s116, %s118
      %p125 = scmp.eq.s32.totalorder %s24, 1
      %p126 = por %p124, %p125
      %p127 = scmp.ne.s32.totalorder %s118, %s119
      %p128 = scmp.eq.s32.totalorder %s24, 0
      %p129 = por %p127, %p128
      %p130 = scmp.ne.s32.totalorder %s118, %s119
      %p131 = scmp.eq.s32.totalorder %s25, 1
      %p132 = por %p130, %p131
      %p134 = scmp.ne.s32.totalorder %s119, %s133
      %p135 = scmp.eq.s32.totalorder %s25, 0
      %p136 = por %p134, %p135
      %s137 = ssub.s32 %s26, %s38
      %s138 = ssub.s32 %s27, %s34
      %s139 = sor.u32 %s137, %s138
      %p140 = scmp.eq.s32.totalorder %s139, 0
      %s142 = sadd.s32 %s141, 1
      %s143 = scalar_select %p140, %s141, %s142
      %p146 = pneg %p140
      %p147 = scmp.eq.s32.totalorder %s19, 1
      %p148 = por %p146, %p147
      %p149 = scmp.ne.s32.totalorder %s141, %s144
      %p150 = scmp.eq.s32.totalorder %s19, 0
      %p151 = por %p149, %p150
      %p152 = scmp.ne.s32.totalorder %s141, %s144
      %p153 = scmp.eq.s32.totalorder %s24, 1
      %p154 = por %p152, %p153
      %p155 = scmp.ne.s32.totalorder %s144, %s145
      %p156 = scmp.eq.s32.totalorder %s24, 0
      %p157 = por %p155, %p156
      %p158 = scmp.ne.s32.totalorder %s144, %s145
      %p159 = scmp.eq.s32.totalorder %s25, 1
      %p160 = por %p158, %p159
      %p162 = scmp.ne.s32.totalorder %s145, %s161
      %p163 = scmp.eq.s32.totalorder %s25, 0
      %p164 = por %p162, %p163
      %p165 = scmp.le.s32.totalorder 1, %s19
      %p166 = scmp.lt.s32.totalorder %s19, 3
      %p167 = pnand %p165, %p166
      %p168 = pneg %p167
      // Predicated region
      $region9: #{tpu_custom_call.1} parent=5 // pred_check
        _
      $region10: #{tpu_custom_call.1} parent=5 // pred_check_branch
        %170 = sbr.rel (%p167) target = $region12
      $region11: #{tpu_custom_call.1} parent=5 // pred_region
        %s171 = ssub.s32 %s19, 1
        // Predicated region
        $region13: #{tpu_custom_call.1} parent=11 // pred_check
          %p172 = pneg %p108
        $region14: #{tpu_custom_call.1} parent=11 // pred_check_branch
          %174 = sbr.rel (%p172) target = $region16
        $region15: #{tpu_custom_call.1} parent=11 // pred_region
          %s176 = ssub.s32 3200, 3200
          %177 = vsyncadd [#allocation8], %s176
          %s178 = sshll.u32 [#allocation9], 4
          %s179 = int_to_ptr.vmem [resolvable:$true] %s178
          %184 = dma.hbm_to_vmem [thread:$0]  %s2, 3200, %s179, [#allocation8], 64, 64, 4
        $region16: #{tpu_custom_call.1} parent=11 // pred_fallthru
          _
        // Predicated region
        $region17: #{tpu_custom_call.1} parent=11 // pred_check
          %p185 = pneg %p129
        $region18: #{tpu_custom_call.1} parent=11 // pred_check_branch
          %187 = sbr.rel (%p185) target = $region20
        $region19: #{tpu_custom_call.1} parent=11 // pred_region
          _
        $region20: #{tpu_custom_call.1} parent=11 // pred_fallthru
          _
      $region12: #{tpu_custom_call.1} parent=5 // pred_fallthru
        _
      %p188 = scmp.lt.s32.totalorder %s19, 2
      // Predicated region
      $region21: #{tpu_custom_call.1} parent=5 // pred_check
        %p189 = pneg %p188
      $region22: #{tpu_custom_call.1} parent=5 // pred_check_branch
        %191 = sbr.rel (%p189) target = $region24
      $region23: #{tpu_custom_call.1} parent=5 // pred_region
        // Predicated region
        $region25: #{tpu_custom_call.1} parent=23 // pred_check
          %p192 = pneg %p53
        $region26: #{tpu_custom_call.1} parent=23 // pred_check_branch
          %194 = sbr.rel (%p192) target = $region28
        $region27: #{tpu_custom_call.1} parent=23 // pred_region
          %s195 = sand.u32 %s43, 1
          %s196 = scalar_lea.sflag [#allocation5], %s195
          %s197 = sand.u32 %s43, 1
          %s198 = smul.addr %s197, 8
          %s199 = scalar_lea.vmem [#allocation4], %s198
          %s201 = ssub.s32 128, 128
          %202 = vsyncadd %s196, %s201
          %s203 = smul.addr %s27, 2
          %s204 = smul.addr %s26, 2
          %s205 = sadd.s32 %s203, %s204
          %s206 = smul.addr %s205, 64
          %s207 = scalar_lea.hbm %s0, %s206
          %s208 = sshll.u32 %s199, 4
          %s209 = int_to_ptr.vmem [resolvable:$true] %s208
          %214 = dma.hbm_to_vmem [thread:$0]  %s207, 128, %s209, %s196, 64, 64, 4
        $region28: #{tpu_custom_call.1} parent=23 // pred_fallthru
          _
        // Predicated region
        $region29: #{tpu_custom_call.1} parent=23 // pred_check
          %p215 = pneg %p81
        $region30: #{tpu_custom_call.1} parent=23 // pred_check_branch
          %217 = sbr.rel (%p215) target = $region32
        $region31: #{tpu_custom_call.1} parent=23 // pred_region
          %s218 = sand.u32 %s19, 1
          %s219 = scalar_lea.sflag [#allocation8], %s218
          %s220 = sand.u32 %s71, 1
          %s221 = smul.addr %s220, 2
          %s222 = scalar_lea.vmem [#allocation7], %s221
          %s224 = ssub.s32 32, 32
          %225 = vsyncadd %s219, %s224
          %s226 = sadd.s32 %s27, %s26
          %s227 = smul.addr %s226, 32
          %s228 = scalar_lea.hbm %s1, %s227
          %s230 = sshll.u32 %s222, 4
          %s231 = int_to_ptr.vmem [resolvable:$true] %s230
          %233 = dma.hbm_to_vmem [thread:$0]  %s228, 32, %s231, %s219
        $region32: #{tpu_custom_call.1} parent=23 // pred_fallthru
          _
      $region24: #{tpu_custom_call.1} parent=5 // pred_fallthru
        _
      %p234 = scmp.le.s32.totalorder 1, %s19
      %p235 = scmp.lt.s32.totalorder %s19, 3
      %p236 = pnand %p234, %p235
      %p237 = pneg %p236
      // Predicated region
      $region33: #{tpu_custom_call.1} parent=5 // pred_check
        _
      $region34: #{tpu_custom_call.1} parent=5 // pred_check_branch
        %239 = sbr.rel (%p236) target = $region36
      $region35: #{tpu_custom_call.1} parent=5 // pred_region
        %s240 = ssub.s32 %s19, 1
        %s241 = sand.u32 %s46, 1
        %s242 = scalar_lea.sflag [#allocation5], %s241
        %s243 = sand.u32 %s46, 1
        %s244 = smul.addr %s243, 8
        %s245 = scalar_lea.vmem [#allocation4], %s244
        // Predicated region
        $region37: #{tpu_custom_call.1} parent=35 // pred_check
          %p246 = pneg %p59
        $region38: #{tpu_custom_call.1} parent=35 // pred_check_branch
          %248 = sbr.rel (%p246) target = $region40
        $region39: #{tpu_custom_call.1} parent=35 // pred_region
          %249 = dma.done %s242, 128
        $region40: #{tpu_custom_call.1} parent=35 // pred_fallthru
          _
        %s250 = sand.u32 %s24, 1
        %s251 = scalar_lea.sflag [#allocation8], %s250
        %s252 = sand.u32 %s74, 1
        %s253 = smul.addr %s252, 2
        %s254 = scalar_lea.vmem [#allocation7], %s253
        // Predicated region
        $region41: #{tpu_custom_call.1} parent=35 // pred_check
          %p255 = pneg %p87
        $region42: #{tpu_custom_call.1} parent=35 // pred_check_branch
          %257 = sbr.rel (%p255) target = $region44
        $region43: #{tpu_custom_call.1} parent=35 // pred_region
          %258 = dma.done %s251, 32
        $region44: #{tpu_custom_call.1} parent=35 // pred_fallthru
          _
        // Predicated region
        $region45: #{tpu_custom_call.1} parent=35 // pred_check
          %p259 = pneg %p108
        $region46: #{tpu_custom_call.1} parent=35 // pred_check_branch
          %261 = sbr.rel (%p259) target = $region48
        $region47: #{tpu_custom_call.1} parent=35 // pred_region
          %262 = dma.done [#allocation8], 3200
        $region48: #{tpu_custom_call.1} parent=35 // pred_fallthru
          _
        %s263 = sand.u32 %s46, 1
        %s264 = scalar_lea.sflag [#allocation5], %s263
        %s265 = sand.u32 %s46, 1
        %s266 = smul.addr %s265, 8
        %s267 = scalar_lea.vmem [#allocation4], %s266
        %p268 = pneg %p59
        %p269 = pneg %p56
        %s270 = sand.u32 %s24, 1
        %s271 = scalar_lea.sflag [#allocation8], %s270
        %s272 = sand.u32 %s74, 1
        %s273 = smul.addr %s272, 2
        %s274 = scalar_lea.vmem [#allocation7], %s273
        %p275 = pneg %p87
        %p276 = pneg %p84
        %p277 = pneg %p108
        %p278 = pneg %p105
        %p279 = pneg %p129
        %p280 = pneg %p126
        %p281 = pneg %p157
        %p282 = pneg %p154
        %s283 = sand.u32 %s144, 1
        %s284 = scalar_lea.sflag [#allocation6], %s283
        %s285 = sand.u32 %s144, 1
        %s286 = smul.addr %s285, 8
        %s287 = scalar_lea.vmem [#allocation10], %s286
        %v289 = vld [vmem:[%s245] sm:$0xf]
        %v290 = vld [vmem:[%s245 + $0x4] sm:$0xf]
        %vm291 = vcmask 650240
        %292 = vst.msk [vmem:[#allocation2] sm:$0xf] %vm291, %v289
        %293 = vst.msk [vmem:[#allocation2 + $0x4] sm:$0xf] %vm291, %v290
        %v294 = vld [vmem:[%s254] sm:$0x3]
        %vm295 = vcmask 648192
        %296 = vst.msk [vmem:[#allocation2 + $0x8] sm:$0x3] %vm295, %v294
        %v297 = vld [vmem:[#allocation2] sm:$0xf]
        %v298 = vld [vmem:[#allocation2 + $0x4] sm:$0xf]
        %v299 = vld [vmem:[#allocation9] sm:$0xf]
        %v300 = vld [vmem:[#allocation9 + $0x4] sm:$0xf]
        %v301 = vld [vmem:[#allocation9 + $0x8] sm:$0xf]
        %v302 = vld [vmem:[#allocation9 + $0xc] sm:$0xf]
        %v303 = vld [vmem:[#allocation9 + $0x10] sm:$0xf]
        %v304 = vld [vmem:[#allocation9 + $0x14] sm:$0xf]
        %v305 = vld [vmem:[#allocation9 + $0x18] sm:$0xf]
        %v306 = vld [vmem:[#allocation9 + $0x1c] sm:$0xf]
        %v307 = vld [vmem:[#allocation9 + $0x20] sm:$0xf]
        %v308 = vld [vmem:[#allocation9 + $0x24] sm:$0xf]
        %v311 = vunpack.c.l.b16 %v297
        %v312 = vunpack.c.l.b16 %v298
        %v313 = vpack.c.b16 %v312, %v311
        %v324 = vunpack.c.l.b16 %v299
        %v325 = vunpack.c.l.b16 %v300
        %v326 = vunpack.c.l.b16 %v301
        %v327 = vunpack.c.l.b16 %v302
        %v328 = vunpack.c.l.b16 %v303
        %v329 = vunpack.c.l.b16 %v304
        %v330 = vunpack.c.l.b16 %v305
        %v331 = vunpack.c.l.b16 %v306
        %v332 = vunpack.c.l.b16 %v307
        %v333 = vunpack.c.l.b16 %v308
        %v334 = vpack.c.b16 %v325, %v324
        %v335 = vpack.c.b16 %v327, %v326
        %v336 = vpack.c.b16 %v329, %v328
        %v337 = vpack.c.b16 %v331, %v330
        %v338 = vpack.c.b16 %v333, %v332
        %vm344 = vcmask 654336
        %v346 = vsel %vm344, %v313, 0
        %348 = vmatprep.subr.bf16.mxu0 0
        %349 = vmatpush1.bf16.msra.mxu0 %v334
        %350 = vmatprep.subr.bf16.mxu0 0
        %351 = vmatpush1.bf16.msra.mxu0 %v335
        %352 = vmatprep.subr.bf16.mxu0 0
        %353 = vmatpush1.bf16.msra.mxu0 %v336
        %354 = vmatprep.subr.bf16.mxu0 0
        %355 = vmatpush1.bf16.msra.mxu0 %v337
        %356 = vmatprep.subr.bf16.mxu0 0
        %357 = vmatpush1.bf16.msra.mxu0 %v338
        %358 = vmatprep.subr.bf16.mxu0 0
        %359 = vmatpush1.bf16.msra.mxu0 0
        %360 = vmatprep.subr.bf16.mxu0 0
        %361 = vmatpush1.bf16.msra.mxu0 0
        %362 = vmatprep.subr.bf16.mxu0 0
        %363 = vmatpush1.bf16.msra.mxu0 0
        %364 = vmatprep.subr.bf16.mxu0 0
        %365 = vmatpush1.bf16.msra.mxu0 0
        %366 = vmatprep.subr.bf16.mxu0 0
        %367 = vmatpush1.bf16.msra.mxu0 0
        %368 = vmatprep.subr.bf16.mxu0 0
        %369 = vmatpush1.bf16.msra.mxu0 0
        %370 = vmatprep.subr.bf16.mxu0 0
        %371 = vmatpush1.bf16.msra.mxu0 0
        %372 = vmatprep.subr.bf16.mxu0 0
        %373 = vmatpush1.bf16.msra.mxu0 0
        %374 = vmatprep.subr.bf16.mxu0 0
        %375 = vmatpush1.bf16.msra.mxu0 0
        %376 = vmatprep.subr.bf16.mxu0 0
        %377 = vmatpush1.bf16.msra.mxu0 0
        %378 = vmatprep.subr.bf16.mxu0 0
        %379 = vmatpush1.bf16.msra.mxu0 0
        %380 = vmatprep.mubr.bf16.mxu0 0
        %381 = vmatmul.mubr.bf16.gmra.mrb[0].mxu0 %v346
        %v382 = vpop.f32.mrb[0].mxu0
        %v383 = vadd.f32 0.0, %v382
        %v384 = vpop.f32.mrb[0].mxu0
        %v385 = vpop.f32.mrb[0].mxu0
        %v386 = vadd.f32 0.0, %v385
        %v387 = vpop.f32.mrb[0].mxu0
        %388 = vdwg.mxu0
        %389 = vst [vmem:[#allocation3] sm:$0xff] %v383
        %390 = vst [vmem:[#allocation3 + $0x8] sm:$0xff] %v386
        %v391 = vld [vmem:[#allocation3] sm:$0xff]
        %v392 = vld [vmem:[#allocation3 + $0x8] sm:$0xff]
        %v393 = vld [vmem:[#allocation2] sm:$0xf]
        %v394 = vld [vmem:[#allocation2 + $0x4] sm:$0xf]
        %v395 = vld [vmem:[#allocation2 + $0x8] sm:$0x1]
        %s396 = scalar_lea.vmem [#allocation9], 40
        %v397 = vld [vmem:[%s396] sm:$0xf]
        %v398 = vld [vmem:[%s396 + $0x4] sm:$0xf]
        %v399 = vld [vmem:[%s396 + $0x8] sm:$0xf]
        %v400 = vld [vmem:[%s396 + $0xc] sm:$0xf]
        %v401 = vld [vmem:[%s396 + $0x10] sm:$0xf]
        %v402 = vld [vmem:[%s396 + $0x14] sm:$0xf]
        %v403 = vld [vmem:[%s396 + $0x18] sm:$0xf]
        %v404 = vld [vmem:[%s396 + $0x1c] sm:$0xf]
        %v405 = vld [vmem:[%s396 + $0x20] sm:$0xf]
        %v406 = vld [vmem:[%s396 + $0x24] sm:$0xf]
        %v410 = vunpack.c.l.b16 %v393
        %v411 = vunpack.c.l.b16 %v394
        %v412 = vunpack.c.l.b16 %v395
        %v413 = vpack.c.b16 %v411, %v410
        %v414 = vpack.c.b16 %v412, %v412
        %vm415 = vsmask.f32 7424
        %v417 = vshrl.u32 %v413, 16
        %v419 = vshll.u32 %v413, 16
        %v421 = vrot.slane %v419, 1
        %v422 = vor.u32 %v417, %v421
        %v424 = vshll.u32 %v414, 16
        %v426 = vrot.slane %v424, 1
        %v427 = vsel %vm415, %v422, %v426
        %v438 = vunpack.c.l.b16 %v397
        %v439 = vunpack.c.l.b16 %v398
        %v440 = vunpack.c.l.b16 %v399
        %v441 = vunpack.c.l.b16 %v400
        %v442 = vunpack.c.l.b16 %v401
        %v443 = vunpack.c.l.b16 %v402
        %v444 = vunpack.c.l.b16 %v403
        %v445 = vunpack.c.l.b16 %v404
        %v446 = vunpack.c.l.b16 %v405
        %v447 = vunpack.c.l.b16 %v406
        %v448 = vpack.c.b16 %v439, %v438
        %v449 = vpack.c.b16 %v441, %v440
        %v450 = vpack.c.b16 %v443, %v442
        %v451 = vpack.c.b16 %v445, %v444
        %v452 = vpack.c.b16 %v447, %v446
        %v459 = vsel %vm344, %v427, 0
        %461 = vmatprep.subr.bf16.mxu0 0
        %462 = vmatpush1.bf16.msra.mxu0 %v448
        %463 = vmatprep.subr.bf16.mxu0 0
        %464 = vmatpush1.bf16.msra.mxu0 %v449
        %465 = vmatprep.subr.bf16.mxu0 0
        %466 = vmatpush1.bf16.msra.mxu0 %v450
        %467 = vmatprep.subr.bf16.mxu0 0
        %468 = vmatpush1.bf16.msra.mxu0 %v451
        %469 = vmatprep.subr.bf16.mxu0 0
        %470 = vmatpush1.bf16.msra.mxu0 %v452
        %471 = vmatprep.subr.bf16.mxu0 0
        %472 = vmatpush1.bf16.msra.mxu0 0
        %473 = vmatprep.subr.bf16.mxu0 0
        %474 = vmatpush1.bf16.msra.mxu0 0
        %475 = vmatprep.subr.bf16.mxu0 0
        %476 = vmatpush1.bf16.msra.mxu0 0
        %477 = vmatprep.subr.bf16.mxu0 0
        %478 = vmatpush1.bf16.msra.mxu0 0
        %479 = vmatprep.subr.bf16.mxu0 0
        %480 = vmatpush1.bf16.msra.mxu0 0
        %481 = vmatprep.subr.bf16.mxu0 0
        %482 = vmatpush1.bf16.msra.mxu0 0
        %483 = vmatprep.subr.bf16.mxu0 0
        %484 = vmatpush1.bf16.msra.mxu0 0
        %485 = vmatprep.subr.bf16.mxu0 0
        %486 = vmatpush1.bf16.msra.mxu0 0
        %487 = vmatprep.subr.bf16.mxu0 0
        %488 = vmatpush1.bf16.msra.mxu0 0
        %489 = vmatprep.subr.bf16.mxu0 0
        %490 = vmatpush1.bf16.msra.mxu0 0
        %491 = vmatprep.subr.bf16.mxu0 0
        %492 = vmatpush1.bf16.msra.mxu0 0
        %493 = vmatprep.mubr.bf16.mxu0 0
        %494 = vmatmul.mubr.bf16.gmra.mrb[0].mxu0 %v459
        %v495 = vpop.f32.mrb[0].mxu0
        %v496 = vadd.f32 0.0, %v495
        %v497 = vpop.f32.mrb[0].mxu0
        %v498 = vpop.f32.mrb[0].mxu0
        %v499 = vadd.f32 0.0, %v498
        %v500 = vpop.f32.mrb[0].mxu0
        %501 = vdwg.mxu0
        %v502 = vadd.f32 %v391, %v496
        %v503 = vadd.f32 %v392, %v499
        %504 = vst [vmem:[#allocation3] sm:$0xff] %v502
        %505 = vst [vmem:[#allocation3 + $0x8] sm:$0xff] %v503
        %v506 = vld [vmem:[#allocation3] sm:$0xff]
        %v507 = vld [vmem:[#allocation3 + $0x8] sm:$0xff]
        %v508 = vld [vmem:[#allocation2] sm:$0xe]
        %v509 = vld [vmem:[#allocation2 + $0x4] sm:$0xf]
        %v510 = vld [vmem:[#allocation2 + $0x8] sm:$0x1]
        %s511 = scalar_lea.vmem [#allocation9], 80
        %v512 = vld [vmem:[%s511] sm:$0xf]
        %v513 = vld [vmem:[%s511 + $0x4] sm:$0xf]
        %v514 = vld [vmem:[%s511 + $0x8] sm:$0xf]
        %v515 = vld [vmem:[%s511 + $0xc] sm:$0xf]
        %v516 = vld [vmem:[%s511 + $0x10] sm:$0xf]
        %v517 = vld [vmem:[%s511 + $0x14] sm:$0xf]
        %v518 = vld [vmem:[%s511 + $0x18] sm:$0xf]
        %v519 = vld [vmem:[%s511 + $0x1c] sm:$0xf]
        %v520 = vld [vmem:[%s511 + $0x20] sm:$0xf]
        %v521 = vld [vmem:[%s511 + $0x24] sm:$0xf]
        %v525 = vunpack.c.l.b16 %v508
        %v526 = vunpack.c.l.b16 %v509
        %v527 = vunpack.c.l.b16 %v510
        %v528 = vpack.c.b16 %v526, %v525
        %v529 = vpack.c.b16 %v527, %v527
        %vm530 = vcmask 1046528
        %v531 = vrot.slane %v528, 1
        %v532 = vrot.slane %v529, 1
        %v533 = vsel %vm530, %v531, %v532
        %v544 = vunpack.c.l.b16 %v512
        %v545 = vunpack.c.l.b16 %v513
        %v546 = vunpack.c.l.b16 %v514
        %v547 = vunpack.c.l.b16 %v515
        %v548 = vunpack.c.l.b16 %v516
        %v549 = vunpack.c.l.b16 %v517
        %v550 = vunpack.c.l.b16 %v518
        %v551 = vunpack.c.l.b16 %v519
        %v552 = vunpack.c.l.b16 %v520
        %v553 = vunpack.c.l.b16 %v521
        %v554 = vpack.c.b16 %v545, %v544
        %v555 = vpack.c.b16 %v547, %v546
        %v556 = vpack.c.b16 %v549, %v548
        %v557 = vpack.c.b16 %v551, %v550
        %v558 = vpack.c.b16 %v553, %v552
        %v565 = vsel %vm344, %v533, 0
        %567 = vmatprep.subr.bf16.mxu0 0
        %568 = vmatpush1.bf16.msra.mxu0 %v554
        %569 = vmatprep.subr.bf16.mxu0 0
        %570 = vmatpush1.bf16.msra.mxu0 %v555
        %571 = vmatprep.subr.bf16.mxu0 0
        %572 = vmatpush1.bf16.msra.mxu0 %v556
        %573 = vmatprep.subr.bf16.mxu0 0
        %574 = vmatpush1.bf16.msra.mxu0 %v557
        %575 = vmatprep.subr.bf16.mxu0 0
        %576 = vmatpush1.bf16.msra.mxu0 %v558
        %577 = vmatprep.subr.bf16.mxu0 0
        %578 = vmatpush1.bf16.msra.mxu0 0
        %579 = vmatprep.subr.bf16.mxu0 0
        %580 = vmatpush1.bf16.msra.mxu0 0
        %581 = vmatprep.subr.bf16.mxu0 0
        %582 = vmatpush1.bf16.msra.mxu0 0
        %583 = vmatprep.subr.bf16.mxu0 0
        %584 = vmatpush1.bf16.msra.mxu0 0
        %585 = vmatprep.subr.bf16.mxu0 0
        %586 = vmatpush1.bf16.msra.mxu0 0
        %587 = vmatprep.subr.bf16.mxu0 0
        %588 = vmatpush1.bf16.msra.mxu0 0
        %589 = vmatprep.subr.bf16.mxu0 0
        %590 = vmatpush1.bf16.msra.mxu0 0
        %591 = vmatprep.subr.bf16.mxu0 0
        %592 = vmatpush1.bf16.msra.mxu0 0
        %593 = vmatprep.subr.bf16.mxu0 0
        %594 = vmatpush1.bf16.msra.mxu0 0
        %595 = vmatprep.subr.bf16.mxu0 0
        %596 = vmatpush1.bf16.msra.mxu0 0
        %597 = vmatprep.subr.bf16.mxu0 0
        %598 = vmatpush1.bf16.msra.mxu0 0
        %599 = vmatprep.mubr.bf16.mxu0 0
        %600 = vmatmul.mubr.bf16.gmra.mrb[0].mxu0 %v565
        %v601 = vpop.f32.mrb[0].mxu0
        %v602 = vadd.f32 0.0, %v601
        %v603 = vpop.f32.mrb[0].mxu0
        %v604 = vpop.f32.mrb[0].mxu0
        %v605 = vadd.f32 0.0, %v604
        %v606 = vpop.f32.mrb[0].mxu0
        %607 = vdwg.mxu0
        %v608 = vadd.f32 %v506, %v602
        %v609 = vadd.f32 %v507, %v605
        %610 = vst [vmem:[#allocation3] sm:$0xff] %v608
        %611 = vst [vmem:[#allocation3 + $0x8] sm:$0xff] %v609
        %v612 = vld [vmem:[#allocation3] sm:$0xff]
        %v613 = vld [vmem:[#allocation3 + $0x8] sm:$0xff]
        %v614 = vld [vmem:[#allocation2] sm:$0xe]
        %v615 = vld [vmem:[#allocation2 + $0x4] sm:$0xf]
        %v616 = vld [vmem:[#allocation2 + $0x8] sm:$0x3]
        %s617 = scalar_lea.vmem [#allocation9], 120
        %v618 = vld [vmem:[%s617] sm:$0xf]
        %v619 = vld [vmem:[%s617 + $0x4] sm:$0xf]
        %v620 = vld [vmem:[%s617 + $0x8] sm:$0xf]
        %v621 = vld [vmem:[%s617 + $0xc] sm:$0xf]
        %v622 = vld [vmem:[%s617 + $0x10] sm:$0xf]
        %v623 = vld [vmem:[%s617 + $0x14] sm:$0xf]
        %v624 = vld [vmem:[%s617 + $0x18] sm:$0xf]
        %v625 = vld [vmem:[%s617 + $0x1c] sm:$0xf]
        %v626 = vld [vmem:[%s617 + $0x20] sm:$0xf]
        %v627 = vld [vmem:[%s617 + $0x24] sm:$0xf]
        %v631 = vunpack.c.l.b16 %v614
        %v632 = vunpack.c.l.b16 %v615
        %v633 = vunpack.c.l.b16 %v616
        %v634 = vpack.c.b16 %v632, %v631
        %v635 = vpack.c.b16 %v633, %v633
        %vm636 = vsmask.f32 6400
        %v638 = vshrl.u32 %v634, 16
        %v640 = vrot.slane %v638, 1
        %v641 = vshll.u32 %v634, 16
        %v643 = vrot.slane %v641, 2
        %v644 = vor.u32 %v640, %v643
        %v646 = vshrl.u32 %v635, 16
        %v648 = vrot.slane %v646, 1
        %v649 = vshll.u32 %v635, 16
        %v651 = vrot.slane %v649, 2
        %v652 = vor.u32 %v648, %v651
        %v653 = vsel %vm636, %v644, %v652
        %v664 = vunpack.c.l.b16 %v618
        %v665 = vunpack.c.l.b16 %v619
        %v666 = vunpack.c.l.b16 %v620
        %v667 = vunpack.c.l.b16 %v621
        %v668 = vunpack.c.l.b16 %v622
        %v669 = vunpack.c.l.b16 %v623
        %v670 = vunpack.c.l.b16 %v624
        %v671 = vunpack.c.l.b16 %v625
        %v672 = vunpack.c.l.b16 %v626
        %v673 = vunpack.c.l.b16 %v627
        %v674 = vpack.c.b16 %v665, %v664
        %v675 = vpack.c.b16 %v667, %v666
        %v676 = vpack.c.b16 %v669, %v668
        %v677 = vpack.c.b16 %v671, %v670
        %v678 = vpack.c.b16 %v673, %v672
        %v685 = vsel %vm344, %v653, 0
        %687 = vmatprep.subr.bf16.mxu0 0
        %688 = vmatpush1.bf16.msra.mxu0 %v674
        %689 = vmatprep.subr.bf16.mxu0 0
        %690 = vmatpush1.bf16.msra.mxu0 %v675
        %691 = vmatprep.subr.bf16.mxu0 0
        %692 = vmatpush1.bf16.msra.mxu0 %v676
        %693 = vmatprep.subr.bf16.mxu0 0
        %694 = vmatpush1.bf16.msra.mxu0 %v677
        %695 = vmatprep.subr.bf16.mxu0 0
        %696 = vmatpush1.bf16.msra.mxu0 %v678
        %697 = vmatprep.subr.bf16.mxu0 0
        %698 = vmatpush1.bf16.msra.mxu0 0
        %699 = vmatprep.subr.bf16.mxu0 0
        %700 = vmatpush1.bf16.msra.mxu0 0
        %701 = vmatprep.subr.bf16.mxu0 0
        %702 = vmatpush1.bf16.msra.mxu0 0
        %703 = vmatprep.subr.bf16.mxu0 0
        %704 = vmatpush1.bf16.msra.mxu0 0
        %705 = vmatprep.subr.bf16.mxu0 0
        %706 = vmatpush1.bf16.msra.mxu0 0
        %707 = vmatprep.subr.bf16.mxu0 0
        %708 = vmatpush1.bf16.msra.mxu0 0
        %709 = vmatprep.subr.bf16.mxu0 0
        %710 = vmatpush1.bf16.msra.mxu0 0
        %711 = vmatprep.subr.bf16.mxu0 0
        %712 = vmatpush1.bf16.msra.mxu0 0
        %713 = vmatprep.subr.bf16.mxu0 0
        %714 = vmatpush1.bf16.msra.mxu0 0
        %715 = vmatprep.subr.bf16.mxu0 0
        %716 = vmatpush1.bf16.msra.mxu0 0
        %717 = vmatprep.subr.bf16.mxu0 0
        %718 = vmatpush1.bf16.msra.mxu0 0
        %719 = vmatprep.mubr.bf16.mxu0 0
        %720 = vmatmul.mubr.bf16.gmra.mrb[0].mxu0 %v685
        %v721 = vpop.f32.mrb[0].mxu0
        %v722 = vadd.f32 0.0, %v721
        %v723 = vpop.f32.mrb[0].mxu0
        %v724 = vpop.f32.mrb[0].mxu0
        %v725 = vadd.f32 0.0, %v724
        %v726 = vpop.f32.mrb[0].mxu0
        %727 = vdwg.mxu0
        %v728 = vadd.f32 %v612, %v722
        %v729 = vadd.f32 %v613, %v725
        %730 = vst [vmem:[#allocation3] sm:$0xff] %v728
        %731 = vst [vmem:[#allocation3 + $0x8] sm:$0xff] %v729
        %v732 = vld [vmem:[#allocation3] sm:$0xff]
        %v733 = vld [vmem:[#allocation3 + $0x8] sm:$0xff]
        %v734 = vld [vmem:[#allocation2] sm:$0xc]
        %v735 = vld [vmem:[#allocation2 + $0x4] sm:$0xf]
        %v736 = vld [vmem:[#allocation2 + $0x8] sm:$0x3]
        %s737 = scalar_lea.vmem [#allocation9], 160
        %v738 = vld [vmem:[%s737] sm:$0xf]
        %v739 = vld [vmem:[%s737 + $0x4] sm:$0xf]
        %v740 = vld [vmem:[%s737 + $0x8] sm:$0xf]
        %v741 = vld [vmem:[%s737 + $0xc] sm:$0xf]
        %v742 = vld [vmem:[%s737 + $0x10] sm:$0xf]
        %v743 = vld [vmem:[%s737 + $0x14] sm:$0xf]
        %v744 = vld [vmem:[%s737 + $0x18] sm:$0xf]
        %v745 = vld [vmem:[%s737 + $0x1c] sm:$0xf]
        %v746 = vld [vmem:[%s737 + $0x20] sm:$0xf]
        %v747 = vld [vmem:[%s737 + $0x24] sm:$0xf]
        %v751 = vunpack.c.l.b16 %v734
        %v752 = vunpack.c.l.b16 %v735
        %v753 = vunpack.c.l.b16 %v736
        %v754 = vpack.c.b16 %v752, %v751
        %v755 = vpack.c.b16 %v753, %v753
        %vm756 = vcmask 1045504
        %v757 = vrot.slane %v754, 2
        %v758 = vrot.slane %v755, 2
        %v759 = vsel %vm756, %v757, %v758
        %v770 = vunpack.c.l.b16 %v738
        %v771 = vunpack.c.l.b16 %v739
        %v772 = vunpack.c.l.b16 %v740
        %v773 = vunpack.c.l.b16 %v741
        %v774 = vunpack.c.l.b16 %v742
        %v775 = vunpack.c.l.b16 %v743
        %v776 = vunpack.c.l.b16 %v744
        %v777 = vunpack.c.l.b16 %v745
        %v778 = vunpack.c.l.b16 %v746
        %v779 = vunpack.c.l.b16 %v747
        %v780 = vpack.c.b16 %v771, %v770
        %v781 = vpack.c.b16 %v773, %v772
        %v782 = vpack.c.b16 %v775, %v774
        %v783 = vpack.c.b16 %v777, %v776
        %v784 = vpack.c.b16 %v779, %v778
        %v791 = vsel %vm344, %v759, 0
        %793 = vmatprep.subr.bf16.mxu0 0
        %794 = vmatpush1.bf16.msra.mxu0 %v780
        %795 = vmatprep.subr.bf16.mxu0 0
        %796 = vmatpush1.bf16.msra.mxu0 %v781
        %797 = vmatprep.subr.bf16.mxu0 0
        %798 = vmatpush1.bf16.msra.mxu0 %v782
        %799 = vmatprep.subr.bf16.mxu0 0
        %800 = vmatpush1.bf16.msra.mxu0 %v783
        %801 = vmatprep.subr.bf16.mxu0 0
        %802 = vmatpush1.bf16.msra.mxu0 %v784
        %803 = vmatprep.subr.bf16.mxu0 0
        %804 = vmatpush1.bf16.msra.mxu0 0
        %805 = vmatprep.subr.bf16.mxu0 0
        %806 = vmatpush1.bf16.msra.mxu0 0
        %807 = vmatprep.subr.bf16.mxu0 0
        %808 = vmatpush1.bf16.msra.mxu0 0
        %809 = vmatprep.subr.bf16.mxu0 0
        %810 = vmatpush1.bf16.msra.mxu0 0
        %811 = vmatprep.subr.bf16.mxu0 0
        %812 = vmatpush1.bf16.msra.mxu0 0
        %813 = vmatprep.subr.bf16.mxu0 0
        %814 = vmatpush1.bf16.msra.mxu0 0
        %815 = vmatprep.subr.bf16.mxu0 0
        %816 = vmatpush1.bf16.msra.mxu0 0
        %817 = vmatprep.subr.bf16.mxu0 0
        %818 = vmatpush1.bf16.msra.mxu0 0
        %819 = vmatprep.subr.bf16.mxu0 0
        %820 = vmatpush1.bf16.msra.mxu0 0
        %821 = vmatprep.subr.bf16.mxu0 0
        %822 = vmatpush1.bf16.msra.mxu0 0
        %823 = vmatprep.subr.bf16.mxu0 0
        %824 = vmatpush1.bf16.msra.mxu0 0
        %825 = vmatprep.mubr.bf16.mxu0 0
        %826 = vmatmul.mubr.bf16.gmra.mrb[0].mxu0 %v791
        %v827 = vpop.f32.mrb[0].mxu0
        %v828 = vadd.f32 0.0, %v827
        %v829 = vpop.f32.mrb[0].mxu0
        %v830 = vpop.f32.mrb[0].mxu0
        %v831 = vadd.f32 0.0, %v830
        %v832 = vpop.f32.mrb[0].mxu0
        %833 = vdwg.mxu0
        %v834 = vadd.f32 %v732, %v828
        %v835 = vadd.f32 %v733, %v831
        %836 = vst [vmem:[#allocation3] sm:$0xff] %v834
        %837 = vst [vmem:[#allocation3 + $0x8] sm:$0xff] %v835
        %v838 = vld [vmem:[#allocation3] sm:$0xff]
        %v839 = vld [vmem:[#allocation3 + $0x8] sm:$0xff]
        %v840 = vld [vmem:[%s3] sm:$0x1]
        %v842 = vlaneseq
        %v843 = vshrl.u32 %v842, 7
        %v844 = vsub.s32 0, %v843
        %v845 = vrot.slane %v840, %v844
        %v847 = vadd.f32 %v838, %v845
        %v848 = vadd.f32 %v839, %v845
        %v849 = vpack.c.bf16 %v848, %v847
        %v851 = vunpack.c.l.b16 %v849
        %v852 = vunpack.c.h.b16 %v849
        %v853 = vpack.c.b16 %v851, %v851
        %v854 = vpack.c.b16 %v852, %v852
        %857 = vst [vmem:[%s287] sm:$0xf] %v853
        %858 = vst [vmem:[%s287 + $0x4] sm:$0xf] %v854
        %s859 = sand.u32 %s144, 1
        %s860 = scalar_lea.sflag [#allocation6], %s859
        %s861 = sand.u32 %s144, 1
        %s862 = smul.addr %s861, 8
        %s863 = scalar_lea.vmem [#allocation10], %s862
        // Predicated region
        $region49: #{tpu_custom_call.1} parent=35 // pred_check
          %p864 = pneg %p154
        $region50: #{tpu_custom_call.1} parent=35 // pred_check_branch
          %866 = sbr.rel (%p864) target = $region52
        $region51: #{tpu_custom_call.1} parent=35 // pred_region
          %s868 = ssub.s32 128, 128
          %869 = vsyncadd %s860, %s868
          %s870 = smul.addr %s29, 2
          %s871 = smul.addr %s28, 2
          %s872 = sadd.s32 %s870, %s871
          %s873 = smul.addr %s872, 64
          %s874 = scalar_lea.hbm %s4, %s873
          %s875 = sshll.u32 %s863, 4
          %s876 = int_to_ptr.vmem [resolvable:$true] %s875
          %881 = dma.vmem_to_hbm [thread:$0]  %s876, 128, %s874, %s860, 64, 64, 4
        $region52: #{tpu_custom_call.1} parent=35 // pred_fallthru
          _
      $region36: #{tpu_custom_call.1} parent=5 // pred_fallthru
        _
      %p882 = scmp.le.s32.totalorder 2, %s19
      // Predicated region
      $region53: #{tpu_custom_call.1} parent=5 // pred_check
        %p883 = pneg %p882
      $region54: #{tpu_custom_call.1} parent=5 // pred_check_branch
        %885 = sbr.rel (%p883) target = $region56
      $region55: #{tpu_custom_call.1} parent=5 // pred_region
        %s886 = ssub.s32 %s19, 2
        // Predicated region
        $region57: #{tpu_custom_call.1} parent=55 // pred_check
          %p887 = pneg %p160
        $region58: #{tpu_custom_call.1} parent=55 // pred_check_branch
          %889 = sbr.rel (%p887) target = $region60
        $region59: #{tpu_custom_call.1} parent=55 // pred_region
          %s890 = sand.u32 %s145, 1
          %s891 = scalar_lea.sflag [#allocation6], %s890
          %s892 = sand.u32 %s145, 1
          %s893 = smul.addr %s892, 8
          %s894 = scalar_lea.vmem [#allocation10], %s893
          %895 = dma.done %s891, 128
        $region60: #{tpu_custom_call.1} parent=55 // pred_fallthru
          _
      $region56: #{tpu_custom_call.1} parent=5 // pred_fallthru
        _
    $region6: #{tpu_custom_call.1} parent=1 // loop_footer
      %s23 = sadd.s32 1, %s19
    $region7: #{tpu_custom_call.1} parent=1 // loop_footer_branch
      %18 = sbr.rel target = $region3
    $region8: #{tpu_custom_call.1} parent=1 // loop_exit
      _
    %896 = vsyncpa [#allocation5], 1
    %s897 = scalar_lea.sflag [#allocation5], 1
    %898 = vsyncpa %s897, 1
    %899 = vsyncpa [#allocation8], 1
    %s900 = scalar_lea.sflag [#allocation8], 1
    %901 = vsyncpa %s900, 1
    %902 = vsyncpa [#allocation6], 1
    %s903 = scalar_lea.sflag [#allocation6], 1
    %904 = vsyncpa %s903, 1

</llo_original>
